<compile_context>
chip_gen: v6e
topology: v6e:2x2x1
jax: 0.10.0
libtpu: 0.0.40
codegen_flags: <defaults>
</compile_context>

<pallas_src>
import numpy as np
import jax
import jax.numpy as jnp
from jax import lax
from jax.experimental import pallas as pl
from jax.experimental.pallas import tpu as pltpu

N_QUBITS = 4
NUM_LAYERS = 1
DIM = 2 ** N_QUBITS  # 16


# ----------------------------------------------------------------------------
# Parameter-only glue (independent of the data x): dense real unitary of
# BasicEntanglerLayers(rotation=RY).  Wire 0 = most-significant bit, matching
# PennyLane's default.qubit ordering.
# ----------------------------------------------------------------------------
def _ry_2x2(theta):
    c = jnp.cos(theta / 2.0)
    s = jnp.sin(theta / 2.0)
    return jnp.stack([jnp.stack([c, -s]), jnp.stack([s, c])]).astype(jnp.float32)


def _kron_all(mats):
    out = mats[0]
    for m in mats[1:]:
        out = jnp.kron(out, m)
    return out


def _single_qubit_on_wire(mat2, wire, n):
    mats = [jnp.eye(2, dtype=jnp.float32)] * n
    mats[wire] = mat2
    return _kron_all(mats)


def _cnot(control, target, n):
    dim = 2 ** n
    U = np.zeros((dim, dim), dtype=np.float32)
    for b in range(dim):
        cbit = (b >> (n - 1 - control)) & 1
        b2 = b ^ (1 << (n - 1 - target)) if cbit else b
        U[b2, b] = 1.0
    return jnp.asarray(U)


def build_entangler_unitary(params):
    """BasicEntanglerLayers(params, wires=range(n), rotation=RY) as a dense matrix."""
    n = N_QUBITS
    U = jnp.eye(DIM, dtype=jnp.float32)
    for l in range(params.shape[0]):
        for w in range(n):                       # per-wire RY rotations
            U = _single_qubit_on_wire(_ry_2x2(params[l, w]), w, n) @ U
        if n == 2:                               # ring of CNOTs
            U = _cnot(0, 1, n) @ U
        elif n > 2:
            for w in range(n):
                U = _cnot(w, (w + 1) % n, n) @ U
    return U


def _zsign_matrix_t(n):
    """(n, DIM): row k holds +1/-1 PauliZ eigenvalues of wire k per basis state."""
    signs = np.zeros((n, 2 ** n), dtype=np.float32)
    for b in range(2 ** n):
        for k in range(n):
            signs[k, b] = 1.0 if ((b >> (n - 1 - k)) & 1) == 0 else -1.0
    return jnp.asarray(signs)


def _expand_matrix_blockdiag():
    """Block-diagonal Kron-expansion selector (32, 8).

    Rows 0..15  pick v01[b >> 2] from input rows 0..3  (wires 0,1 sub-state).
    Rows 16..31 pick v23[b & 3]  from input rows 4..7  (wires 2,3 sub-state).
    One MXU matmul produces both 16-row expansion factors at once.
    """
    e = np.zeros((2 * DIM, 8), dtype=np.float32)
    for b in range(DIM):
        e[b, b >> 2] = 1.0
        e[DIM + b, 4 + (b & 3)] = 1.0
    return jnp.asarray(e)


def _round_up(x, m):
    return ((x + m - 1) // m) * m


# ----------------------------------------------------------------------------
# Pallas kernel: embedding + entangling evolution + <Z> readout, samples on lanes
# ----------------------------------------------------------------------------
def qbottleneck_kernel(x_ref, u_ref, ebd_ref, zsign_ref, out_ref):
    # x_ref    : (Q, Tn)     RY angles, samples on the lane axis (streamed)
    # u_ref    : (DIM, DIM)  entangler unitary                   (grid-resident)
    # ebd_ref  : (2*DIM, 8)  block-diag Kron expansion selector  (resident)
    # zsign_ref: (Q, DIM)    PauliZ eigenvalue signs             (resident)
    # out_ref  : (Q, Tn)     <Z_k> per sample
    tile = x_ref.shape[1]
    theta = x_ref[...] * 0.5
    c = jnp.cos(theta)                      # (Q, Tn)   EUP
    s = jnp.sin(theta)                      # (Q, Tn)   EUP

    # Fused two-qubit sub-states, (8, Tn):
    #   rows 0..3: v01[r] = a0(r>>1) * a1(r&1)   with a(0)=cos, a(1)=sin
    #   rows 4..7: v23[r] = a2(r>>1) * a3(r&1)
    # Row-constant masks -> constant-mask vselects on the VPU.
    r8 = lax.broadcasted_iota(jnp.int32, (8, tile), 0)
    g = (r8 >> 2) & 1                       # 0 -> wires (0,1), 1 -> wires (2,3)
    hi = (r8 >> 1) & 1
    lo = r8 & 1
    first = jnp.where(hi == 0,
                      jnp.where(g == 0, c[0:1], c[2:3]),
                      jnp.where(g == 0, s[0:1], s[2:3]))
    second = jnp.where(lo == 0,
                       jnp.where(g == 0, c[1:2], c[3:4]),
                       jnp.where(g == 0, s[1:2], s[3:4]))
    v = first * second                      # (8, Tn)

    # One block-diagonal MXU push expands both factors to 16 rows each:
    #   r[b]       = v01[b >> 2]      (rows 0..15)
    #   r[16 + b]  = v23[b & 3]       (rows 16..31)
    r = jnp.dot(ebd_ref[...], v, preferred_element_type=jnp.float32)   # (32, Tn)
    state = r[0:DIM, :] * r[DIM:2 * DIM, :]                            # (16, Tn)

    # Entangling layers: column state vectors, psi' = U_ent @ psi  (MXU)
    state = jnp.dot(u_ref[...], state, preferred_element_type=jnp.float32)

    probs = state * state                   # real amplitudes -> probabilities

    # <Z_k> = sum_b zsign[k, b] * probs[b, :]                        (MXU)
    out_ref[...] = jnp.dot(zsign_ref[...], probs, preferred_element_type=jnp.float32)


def qbottleneck_forward(x, params, tile_n=16384):
    """x: (B, C, Q) angles -> (B, C, Q) PauliZ expectations, float32."""
    B, C, Q = x.shape
    assert Q == N_QUBITS == 4, "kernel assumes n_qubits == num_features == 4"
    N = B * C

    # Parameter-only setup (data independent).
    u_ent = build_entangler_unitary(params)      # (16, 16)
    zsign = _zsign_matrix_t(Q)                   # (4, 16)
    ebd = _expand_matrix_blockdiag()             # (32, 8)

    # Samples on the lane axis; pad N to a lane-aligned tile multiple.
    xs_t = jnp.transpose(x.reshape(N, Q).astype(jnp.float32))   # (Q, N)
    tile = min(tile_n, _round_up(N, 128))
    n_pad = _round_up(N, tile)
    xs_t = jnp.pad(xs_t, ((0, 0), (0, n_pad - N)))

    grid = (n_pad // tile,)
    cost = pl.CostEstimate(
        flops=n_pad * (2 * (2 * DIM) * 8 + 2 * DIM * DIM + 2 * Q * DIM + 3 * DIM + 8 + 2 * Q),
        transcendentals=2 * Q * n_pad,
        bytes_accessed=4 * n_pad * (2 * Q) + 4 * (DIM * DIM + Q * DIM + 2 * DIM * 8),
    )

    out = pl.pallas_call(
        qbottleneck_kernel,
        out_shape=jax.ShapeDtypeStruct((Q, n_pad), jnp.float32),
        grid_spec=pltpu.PrefetchScalarGridSpec(
            num_scalar_prefetch=0,
            grid=grid,
            in_specs=[
                pl.BlockSpec((Q, tile), lambda i: (0, i)),        # streamed angles
                pl.BlockSpec((DIM, DIM), lambda i: (0, 0)),       # resident U_ent
                pl.BlockSpec((2 * DIM, 8), lambda i: (0, 0)),     # resident expansion
                pl.BlockSpec((Q, DIM), lambda i: (0, 0)),         # resident zsign
            ],
            out_specs=pl.BlockSpec((Q, tile), lambda i: (0, i)),
        ),
        compiler_params=pltpu.CompilerParams(
            dimension_semantics=("parallel",)),
        cost_estimate=cost,
    )(xs_t, u_ent, ebd, zsign)

    return jnp.transpose(out[:, :N]).reshape(B, C, Q)


# ----------------------------------------------------------------------------
# Pure-JAX reference (independent gate-by-gate simulation) for verification
# ----------------------------------------------------------------------------
def reference_forward(x, params):
    B, C, Q = x.shape
    u_ent = build_entangler_unitary(params)
    zsign_t = _zsign_matrix_t(Q)

    def per_sample(angles):
        psi = jnp.zeros((DIM,), jnp.float32).at[0].set(1.0)
        for w in range(Q):
            psi = _single_qubit_on_wire(_ry_2x2(angles[w]), w, Q) @ psi
        psi = u_ent @ psi
        probs = psi * psi
        return zsign_t @ probs

    flat = x.reshape(B * C, Q).astype(jnp.float32)
    out = jax.vmap(per_sample)(flat)
    return out.reshape(B, C, Q)


if __name__ == "__main__":
    key = jax.random.PRNGKey(0)
    kx, kp = jax.random.split(key)

    B, C = 2, 4                                   # small shapes consistent with forward()
    x = jax.random.uniform(kx, (B, C, N_QUBITS), jnp.float32, 0.0, float(np.pi))
    # deterministic parameter init, same distribution as the module: U(0, pi)
    params = jax.random.uniform(kp, (NUM_LAYERS, N_QUBITS), jnp.float32, 0.0, float(np.pi))

    out = qbottleneck_forward(x, params)
    out = jax.block_until_ready(out)

    ref = reference_forward(x, params)
    assert out.shape == (B, C, N_QUBITS) and out.dtype == jnp.float32
    assert jnp.allclose(out, ref, atol=1e-5), (np.asarray(out), np.asarray(ref))

    print("KERNEL_OK")
</pallas_src>

<mosaic_0001>
module attributes {stable_mosaic.version = 11 : i64} {
  func.func @qbottleneck_kernel(%arg0: i32, %arg1: memref<4x128xf32, #tpu.memory_space<vmem>>, %arg2: memref<16x16xf32, #tpu.memory_space<vmem>>, %arg3: memref<32x8xf32, #tpu.memory_space<vmem>>, %arg4: memref<4x16xf32, #tpu.memory_space<vmem>>, %arg5: memref<4x128xf32, #tpu.memory_space<vmem>>) attributes {dimension_semantics = [#tpu.dimension_semantics<parallel>], iteration_bounds = array<i64: 1>, scalar_prefetch = 0 : i64, scratch_operands = 0 : i64, tpu.core_type = #tpu.core_type<tc>, window_params = [{transform_indices = @transform_0, window_bounds = array<i64: 4, 128>}, {pipeline_mode = #tpu.pipeline_mode<synchronous>, transform_indices = @transform_1, window_bounds = array<i64: 16, 16>}, {pipeline_mode = #tpu.pipeline_mode<synchronous>, transform_indices = @transform_2, window_bounds = array<i64: 32, 8>}, {pipeline_mode = #tpu.pipeline_mode<synchronous>, transform_indices = @transform_3, window_bounds = array<i64: 4, 16>}, {transform_indices = @transform_4, window_bounds = array<i64: 4, 128>}]} {
    %c0 = arith.constant 0 : index
    %c0_0 = arith.constant 0 : index
    %0 = vector.load %arg1[%c0, %c0_0] : memref<4x128xf32, #tpu.memory_space<vmem>>, vector<4x128xf32>
    %cst = arith.constant 5.000000e-01 : f32
    %1 = vector.broadcast %cst : f32 to vector<4x128xf32>
    %2 = arith.mulf %0, %1 : vector<4x128xf32>
    %3 = math.cos %2 : vector<4x128xf32>
    %4 = math.sin %2 : vector<4x128xf32>
    %5 = tpu.iota {dimensions = array<i32: 0>} : vector<8x128xi32>
    %c2_i32 = arith.constant 2 : i32
    %6 = vector.broadcast %c2_i32 : i32 to vector<8x128xi32>
    %7 = arith.shrsi %5, %6 : vector<8x128xi32>
    %c1_i32 = arith.constant 1 : i32
    %8 = vector.broadcast %c1_i32 : i32 to vector<8x128xi32>
    %9 = arith.andi %7, %8 : vector<8x128xi32>
    %c1_i32_1 = arith.constant 1 : i32
    %10 = vector.broadcast %c1_i32_1 : i32 to vector<8x128xi32>
    %11 = arith.shrsi %5, %10 : vector<8x128xi32>
    %c1_i32_2 = arith.constant 1 : i32
    %12 = vector.broadcast %c1_i32_2 : i32 to vector<8x128xi32>
    %13 = arith.andi %11, %12 : vector<8x128xi32>
    %c1_i32_3 = arith.constant 1 : i32
    %14 = vector.broadcast %c1_i32_3 : i32 to vector<8x128xi32>
    %15 = arith.andi %5, %14 : vector<8x128xi32>
    %c0_i32 = arith.constant 0 : i32
    %16 = vector.broadcast %c0_i32 : i32 to vector<8x128xi32>
    %17 = arith.cmpi eq, %13, %16 : vector<8x128xi32>
    %c0_i32_4 = arith.constant 0 : i32
    %18 = vector.broadcast %c0_i32_4 : i32 to vector<8x128xi32>
    %19 = arith.cmpi eq, %9, %18 : vector<8x128xi32>
    %20 = vector.extract_strided_slice %3 {offsets = [0, 0], sizes = [1, 128], strides = [1, 1]} : vector<4x128xf32> to vector<1x128xf32>
    %21 = vector.extract_strided_slice %3 {offsets = [2, 0], sizes = [1, 128], strides = [1, 1]} : vector<4x128xf32> to vector<1x128xf32>
    %22 = vector.shape_cast %20 : vector<1x128xf32> to vector<1x128xf32>
    %23 = vector.broadcast %22 : vector<1x128xf32> to vector<8x128xf32>
    %24 = vector.shape_cast %21 : vector<1x128xf32> to vector<1x128xf32>
    %25 = vector.broadcast %24 : vector<1x128xf32> to vector<8x128xf32>
    %26 = arith.select %19, %23, %25 : vector<8x128xi1>, vector<8x128xf32>
    %c0_i32_5 = arith.constant 0 : i32
    %27 = vector.broadcast %c0_i32_5 : i32 to vector<8x128xi32>
    %28 = arith.cmpi eq, %9, %27 : vector<8x128xi32>
    %29 = vector.extract_strided_slice %4 {offsets = [0, 0], sizes = [1, 128], strides = [1, 1]} : vector<4x128xf32> to vector<1x128xf32>
    %30 = vector.extract_strided_slice %4 {offsets = [2, 0], sizes = [1, 128], strides = [1, 1]} : vector<4x128xf32> to vector<1x128xf32>
    %31 = vector.shape_cast %29 : vector<1x128xf32> to vector<1x128xf32>
    %32 = vector.broadcast %31 : vector<1x128xf32> to vector<8x128xf32>
    %33 = vector.shape_cast %30 : vector<1x128xf32> to vector<1x128xf32>
    %34 = vector.broadcast %33 : vector<1x128xf32> to vector<8x128xf32>
    %35 = arith.select %28, %32, %34 : vector<8x128xi1>, vector<8x128xf32>
    %36 = arith.select %17, %26, %35 : vector<8x128xi1>, vector<8x128xf32>
    %c0_i32_6 = arith.constant 0 : i32
    %37 = vector.broadcast %c0_i32_6 : i32 to vector<8x128xi32>
    %38 = arith.cmpi eq, %15, %37 : vector<8x128xi32>
    %c0_i32_7 = arith.constant 0 : i32
    %39 = vector.broadcast %c0_i32_7 : i32 to vector<8x128xi32>
    %40 = arith.cmpi eq, %9, %39 : vector<8x128xi32>
    %41 = vector.extract_strided_slice %3 {offsets = [1, 0], sizes = [1, 128], strides = [1, 1]} : vector<4x128xf32> to vector<1x128xf32>
    %42 = vector.extract_strided_slice %3 {offsets = [3, 0], sizes = [1, 128], strides = [1, 1]} : vector<4x128xf32> to vector<1x128xf32>
    %43 = vector.shape_cast %41 : vector<1x128xf32> to vector<1x128xf32>
    %44 = vector.broadcast %43 : vector<1x128xf32> to vector<8x128xf32>
    %45 = vector.shape_cast %42 : vector<1x128xf32> to vector<1x128xf32>
    %46 = vector.broadcast %45 : vector<1x128xf32> to vector<8x128xf32>
    %47 = arith.select %40, %44, %46 : vector<8x128xi1>, vector<8x128xf32>
    %c0_i32_8 = arith.constant 0 : i32
    %48 = vector.broadcast %c0_i32_8 : i32 to vector<8x128xi32>
    %49 = arith.cmpi eq, %9, %48 : vector<8x128xi32>
    %50 = vector.extract_strided_slice %4 {offsets = [1, 0], sizes = [1, 128], strides = [1, 1]} : vector<4x128xf32> to vector<1x128xf32>
    %51 = vector.extract_strided_slice %4 {offsets = [3, 0], sizes = [1, 128], strides = [1, 1]} : vector<4x128xf32> to vector<1x128xf32>
    %52 = vector.shape_cast %50 : vector<1x128xf32> to vector<1x128xf32>
    %53 = vector.broadcast %52 : vector<1x128xf32> to vector<8x128xf32>
    %54 = vector.shape_cast %51 : vector<1x128xf32> to vector<1x128xf32>
    %55 = vector.broadcast %54 : vector<1x128xf32> to vector<8x128xf32>
    %56 = arith.select %49, %53, %55 : vector<8x128xi1>, vector<8x128xf32>
    %57 = arith.select %38, %47, %56 : vector<8x128xi1>, vector<8x128xf32>
    %58 = arith.mulf %36, %57 : vector<8x128xf32>
    %c0_9 = arith.constant 0 : index
    %c0_10 = arith.constant 0 : index
    %59 = vector.load %arg3[%c0_9, %c0_10] : memref<32x8xf32, #tpu.memory_space<vmem>>, vector<32x8xf32>
    %cst_11 = arith.constant dense<0.000000e+00> : vector<32x128xf32>
    %60 = tpu.matmul %59, %58, %cst_11 {dimension_numbers = #tpu.dot_dimension_numbers<[1], [0], [0], [1], [0, 0, 1, 1], [], []>} : vector<32x8xf32>, vector<8x128xf32>, vector<32x128xf32> -> vector<32x128xf32>
    %61 = vector.extract_strided_slice %60 {offsets = [0, 0], sizes = [16, 128], strides = [1, 1]} : vector<32x128xf32> to vector<16x128xf32>
    %62 = vector.extract_strided_slice %60 {offsets = [16, 0], sizes = [16, 128], strides = [1, 1]} : vector<32x128xf32> to vector<16x128xf32>
    %63 = arith.mulf %61, %62 : vector<16x128xf32>
    %c0_12 = arith.constant 0 : index
    %c0_13 = arith.constant 0 : index
    %64 = vector.load %arg2[%c0_12, %c0_13] : memref<16x16xf32, #tpu.memory_space<vmem>>, vector<16x16xf32>
    %cst_14 = arith.constant dense<0.000000e+00> : vector<16x128xf32>
    %65 = tpu.matmul %64, %63, %cst_14 {dimension_numbers = #tpu.dot_dimension_numbers<[1], [0], [0], [1], [0, 0, 1, 1], [], []>} : vector<16x16xf32>, vector<16x128xf32>, vector<16x128xf32> -> vector<16x128xf32>
    %66 = arith.mulf %65, %65 : vector<16x128xf32>
    %c0_15 = arith.constant 0 : index
    %c0_16 = arith.constant 0 : index
    %67 = vector.load %arg4[%c0_15, %c0_16] : memref<4x16xf32, #tpu.memory_space<vmem>>, vector<4x16xf32>
    %cst_17 = arith.constant dense<0.000000e+00> : vector<4x128xf32>
    %68 = tpu.matmul %67, %66, %cst_17 {dimension_numbers = #tpu.dot_dimension_numbers<[1], [0], [0], [1], [0, 0, 1, 1], [], []>} : vector<4x16xf32>, vector<16x128xf32>, vector<4x128xf32> -> vector<4x128xf32>
    %c0_18 = arith.constant 0 : index
    %c0_19 = arith.constant 0 : index
    %69 = vector.load %arg5[%c0_18, %c0_19] : memref<4x128xf32, #tpu.memory_space<vmem>>, vector<4x128xf32>
    tpu.vector_store %arg5[%c0_18, %c0_19], %68 {strides = array<i32>} : memref<4x128xf32, #tpu.memory_space<vmem>>, vector<4x128xf32>,
    return
  }
  func.func @transform_0(%arg0: i32) -> (i32, i32) {
    %c0_i32 = arith.constant 0 : i32
    %c0_i32_0 = arith.constant 0 : i32
    return %c0_i32, %arg0 : i32, i32
  }
  func.func @transform_1(%arg0: i32) -> (i32, i32) {
    %c0_i32 = arith.constant 0 : i32
    %c0_i32_0 = arith.constant 0 : i32
    %c0_i32_1 = arith.constant 0 : i32
    return %c0_i32, %c0_i32_0 : i32, i32
  }
  func.func @transform_2(%arg0: i32) -> (i32, i32) {
    %c0_i32 = arith.constant 0 : i32
    %c0_i32_0 = arith.constant 0 : i32
    %c0_i32_1 = arith.constant 0 : i32
    return %c0_i32, %c0_i32_0 : i32, i32
  }
  func.func @transform_3(%arg0: i32) -> (i32, i32) {
    %c0_i32 = arith.constant 0 : i32
    %c0_i32_0 = arith.constant 0 : i32
    %c0_i32_1 = arith.constant 0 : i32
    return %c0_i32, %c0_i32_0 : i32, i32
  }
  func.func @transform_4(%arg0: i32) -> (i32, i32) {
    %c0_i32 = arith.constant 0 : i32
    %c0_i32_0 = arith.constant 0 : i32
    return %c0_i32, %arg0 : i32, i32
  }
}

</mosaic_0001>

<llo_original>
// kernel: tpu_custom_call.1
$region0: #{tpu_custom_call.1}
  #allocation0 [shape = 'u32[]', space=smem, size = 0x4, offset = 0x4, fixed_abs, tag = 'smem constant byte address 0x4 - core index']
  #allocation1 [shape = 'u32[144,128]{1,0:T(1,128)}', space=vmem, size = 0x12000, scoped, tag = 'internal scratch']
  %s0 = inlined_call_operand.vmem [shape: f32[4,128], index: 0, kind: input, shape index: {}]
  %s1 = inlined_call_operand.vmem [shape: f32[16,16], index: 1, kind: input, shape index: {}]
  %s2 = inlined_call_operand.vmem [shape: f32[32,8], index: 2, kind: input, shape index: {}]
  %s3 = inlined_call_operand.vmem [shape: f32[4,16], index: 3, kind: input, shape index: {}]
  %s4 = inlined_call_operand.hbm [shape: f32[4,128], index: 4, kind: output, shape index: {}]
  %s5 = sld [smem:[#allocation0]]
  $region26: #{tpu_custom_call.1} parent=0
    _
  %s7 = ssub.s32 1, %s5
  %s8 = scalar_select 0, %s7, %s5
  $region1: #{tpu_custom_call.1} parent=0
    #allocation2 [shape = 'u8[2048]{0}', space=vmem, size = 0x800, scoped, tag = 'output window, operand 0, single buffered']
    #allocation3 [shape = 's32[1]{0}', space=sflag, size = 0x4, scoped, tag = 'scoped memory for tpu_custom_call.1']
    %9 = vsyncpa [#allocation3], 0
    // Predicated region
    $region2: #{tpu_custom_call.1} parent=1 // pred_check
      _
    $region3: #{tpu_custom_call.1} parent=1 // pred_check_branch
      %11 = sbr.rel (0) target = $region5
    $region4: #{tpu_custom_call.1} parent=1 // pred_region
      _
    $region5: #{tpu_custom_call.1} parent=1 // pred_fallthru
      _
    // Predicated region
    $region6: #{tpu_custom_call.1} parent=1 // pred_check
      _
    $region7: #{tpu_custom_call.1} parent=1 // pred_check_branch
      %13 = sbr.rel (0) target = $region9
    $region8: #{tpu_custom_call.1} parent=1 // pred_region
      _
    $region9: #{tpu_custom_call.1} parent=1 // pred_fallthru
      _
    // Predicated region
    $region10: #{tpu_custom_call.1} parent=1 // pred_check
      _
    $region11: #{tpu_custom_call.1} parent=1 // pred_check_branch
      %15 = sbr.rel (0) target = $region13
    $region12: #{tpu_custom_call.1} parent=1 // pred_region
      _
    $region13: #{tpu_custom_call.1} parent=1 // pred_fallthru
      _
    // Predicated region
    $region14: #{tpu_custom_call.1} parent=1 // pred_check
      _
    $region15: #{tpu_custom_call.1} parent=1 // pred_check_branch
      %17 = sbr.rel (0) target = $region17
    $region16: #{tpu_custom_call.1} parent=1 // pred_region
      _
    $region17: #{tpu_custom_call.1} parent=1 // pred_fallthru
      _
    %v18 = vld [vmem:[%s0] sm:$0xf]
    %v19 = vmul.f32 %v18, 0.5
    %v20 = vand.u32 2147483647, %v19
    %vm21 = vcmp.le.f32.partialorder %v20, 0.7853982
    %vm22 = vcmp.lt.s32.totalorder %v19, 0
    %v23 = vand.u32 %v19, 2139095040
    %v24 = vshrl.u32 %v23, 23
    %v25 = vsub.s32 %v24, 127
    %v26 = vand.u32 2147483647, %v19
    %v27 = vand.u32 %v26, 8388607
    %v28 = vor.u32 %v27, 8388608
    %v29 = vsub.s32 0, %v28
    %v30 = vadd.s32 %v25, 1
    %vm31 = vcmp.gt.s32.totalorder %v30, 0
    %v32 = vsel %vm31, %v30, 0
    %v33 = vshrl.u32 %v32, 5
    %v34 = vand.u32 %v32, 31
    %v35 = vsub.s32 32, %v34
    %v36 = vshrl.u32 683565275, %v35
    %v37 = vshll.u32 683565275, %v34
    %v38 = vshrl.u32 2475754826, %v35
    %v39 = vor.u32 %v37, %v38
    %v40 = vshll.u32 2475754826, %v34
    %v41 = vshrl.u32 2131351028, %v35
    %v42 = vor.u32 %v40, %v41
    %v43 = vshll.u32 2131351028, %v34
    %v44 = vshrl.u32 2102212464, %v35
    %v45 = vor.u32 %v43, %v44
    %v46 = vshll.u32 2102212464, %v34
    %v47 = vshrl.u32 920167782, %v35
    %v48 = vor.u32 %v46, %v47
    %v49 = vshll.u32 920167782, %v34
    %v50 = vshrl.u32 1326507024, %v35
    %v51 = vor.u32 %v49, %v50
    %vm52 = vcmp.lt.s32.totalorder %v33, 1
    %vm53 = vcmp.lt.s32.totalorder %v33, 2
    %vm54 = vcmp.lt.s32.totalorder %v33, 3
    %vm55 = vcmp.lt.s32.totalorder %v33, 4
    %v56 = vsel %vm52, %v36, %v39
    %v57 = vsel %vm55, %v45, 2102212464
    %v58 = vsel %vm54, %v42, %v57
    %v59 = vsel %vm53, %v56, %v58
    %v60 = vsel %vm52, %v39, %v42
    %v61 = vsel %vm55, %v48, 920167782
    %v62 = vsel %vm54, %v45, %v61
    %v63 = vsel %vm53, %v60, %v62
    %v64 = vsel %vm52, %v42, %v45
    %v65 = vsel %vm55, %v51, 1326507024
    %v66 = vsel %vm54, %v48, %v65
    %v67 = vsel %vm53, %v64, %v66
    %v68 = vshll.u32 %v28, 8
    %v69 = vmul.u32.u64.compose %v68, %v67
    %v70 = vextract.low.u32 %v69
    %v71 = vextract.high.u32 %v69
    %v72 = vmul.u32.u64.compose %v68, %v63
    %v73 = vextract.low.u32 %v72
    %v74 = vextract.high.u32 %v72
    %v75 = vmul.u32 %v68, %v59
    %v76 = vadd.s32 %v71, %v73
    %vm77 = vc.u32 %v71, %v73
    %v78 = vadd.s32 %v74, 1
    %v79 = vsel %vm77, %v78, %v74
    %v80 = vadd.s32 %v75, %v79
    %v81 = vadd.s32 %v80, 536870912
    %v82 = vshrl.u32 %v81, 30
    %v83 = vshll.u32 %v82, 30
    %v84 = vsub.s32 %v80, %v83
    %vm85 = vcmp.lt.s32.totalorder %v84, 0
    %v86 = vsub.s32 0, %v84
    %v87 = vsel %vm85, %v86, %v84
    %v88 = vclz %v87
    %v89 = vsub.s32 %v88, 2
    %vm90 = vcmp.gt.s32.totalorder 0, %v89
    %v91 = vsel %vm90, 0, %v89
    %v92 = vsub.s32 32, %v91
    %v93 = vshll.u32 %v84, %v91
    %v94 = vshrl.u32 %v76, %v92
    %v95 = vor.u32 %v93, %v94
    %v96 = vsub.s32 4294967266, %v91
    %v97 = vadd.s32 %v96, 127
    %v98 = vshll.u32 %v97, 23
    %v99 = vor.u32 4788187, %v98
    %v100 = vand.u32 2147483647, %v99
    %v102 = vcvt.s32.f32 %v95
    %v103 = vmul.f32 %v102, %v100
    %v104 = vxor.u32 %v103, 2147483648
    %v105 = vsel %vm22, %v104, %v103
    %v106 = vsub.s32 4, %v82
    %v107 = vsel %vm22, %v106, %v82
    %v108 = vsel %vm21, %v19, %v105
    %v109 = vsel %vm21, 0, %v107
    %v110 = vcosq.f32.pop %v108
    %v111 = vsinq.f32.pop %v108
    %vm112 = vweird.f32 %v19
    %v113 = vand.u32 %v109, 3
    %vm114 = vcmp.lt.s32.totalorder %v113, 2
    %vm115 = vcmp.eq.s32.totalorder %v113, 0
    %v116 = vxor.u32 %v111, 2147483648
    %v117 = vsel %vm115, %v110, %v116
    %vm118 = vcmp.eq.s32.totalorder %v113, 2
    %v119 = vxor.u32 %v110, 2147483648
    %v120 = vsel %vm118, %v119, %v111
    %v121 = vsel %vm114, %v117, %v120
    %v122 = vsel %vm112, nan, %v121
    %v123 = vand.u32 2147483647, %v19
    %vm124 = vcmp.le.f32.partialorder %v123, 0.7853982
    %vm125 = vcmp.lt.s32.totalorder %v19, 0
    %v126 = vand.u32 %v19, 2139095040
    %v127 = vshrl.u32 %v126, 23
    %v128 = vsub.s32 %v127, 127
    %v129 = vand.u32 2147483647, %v19
    %v130 = vand.u32 %v129, 8388607
    %v131 = vor.u32 %v130, 8388608
    %v132 = vsub.s32 0, %v131
    %v133 = vadd.s32 %v128, 1
    %vm134 = vcmp.gt.s32.totalorder %v133, 0
    %v135 = vsel %vm134, %v133, 0
    %v136 = vshrl.u32 %v135, 5
    %v137 = vand.u32 %v135, 31
    %v138 = vsub.s32 32, %v137
    %v139 = vshrl.u32 683565275, %v138
    %v140 = vshll.u32 683565275, %v137
    %v141 = vshrl.u32 2475754826, %v138
    %v142 = vor.u32 %v140, %v141
    %v143 = vshll.u32 2475754826, %v137
    %v144 = vshrl.u32 2131351028, %v138
    %v145 = vor.u32 %v143, %v144
    %v146 = vshll.u32 2131351028, %v137
    %v147 = vshrl.u32 2102212464, %v138
    %v148 = vor.u32 %v146, %v147
    %v149 = vshll.u32 2102212464, %v137
    %v150 = vshrl.u32 920167782, %v138
    %v151 = vor.u32 %v149, %v150
    %v152 = vshll.u32 920167782, %v137
    %v153 = vshrl.u32 1326507024, %v138
    %v154 = vor.u32 %v152, %v153
    %vm155 = vcmp.lt.s32.totalorder %v136, 1
    %vm156 = vcmp.lt.s32.totalorder %v136, 2
    %vm157 = vcmp.lt.s32.totalorder %v136, 3
    %vm158 = vcmp.lt.s32.totalorder %v136, 4
    %v159 = vsel %vm155, %v139, %v142
    %v160 = vsel %vm158, %v148, 2102212464
    %v161 = vsel %vm157, %v145, %v160
    %v162 = vsel %vm156, %v159, %v161
    %v163 = vsel %vm155, %v142, %v145
    %v164 = vsel %vm158, %v151, 920167782
    %v165 = vsel %vm157, %v148, %v164
    %v166 = vsel %vm156, %v163, %v165
    %v167 = vsel %vm155, %v145, %v148
    %v168 = vsel %vm158, %v154, 1326507024
    %v169 = vsel %vm157, %v151, %v168
    %v170 = vsel %vm156, %v167, %v169
    %v171 = vshll.u32 %v131, 8
    %v172 = vmul.u32.u64.compose %v171, %v170
    %v173 = vextract.low.u32 %v172
    %v174 = vextract.high.u32 %v172
    %v175 = vmul.u32.u64.compose %v171, %v166
    %v176 = vextract.low.u32 %v175
    %v177 = vextract.high.u32 %v175
    %v178 = vmul.u32 %v171, %v162
    %v179 = vadd.s32 %v174, %v176
    %vm180 = vc.u32 %v174, %v176
    %v181 = vadd.s32 %v177, 1
    %v182 = vsel %vm180, %v181, %v177
    %v183 = vadd.s32 %v178, %v182
    %v184 = vadd.s32 %v183, 536870912
    %v185 = vshrl.u32 %v184, 30
    %v186 = vshll.u32 %v185, 30
    %v187 = vsub.s32 %v183, %v186
    %vm188 = vcmp.lt.s32.totalorder %v187, 0
    %v189 = vsub.s32 0, %v187
    %v190 = vsel %vm188, %v189, %v187
    %v191 = vclz %v190
    %v192 = vsub.s32 %v191, 2
    %vm193 = vcmp.gt.s32.totalorder 0, %v192
    %v194 = vsel %vm193, 0, %v192
    %v195 = vsub.s32 32, %v194
    %v196 = vshll.u32 %v187, %v194
    %v197 = vshrl.u32 %v179, %v195
    %v198 = vor.u32 %v196, %v197
    %v199 = vsub.s32 4294967266, %v194
    %v200 = vadd.s32 %v199, 127
    %v201 = vshll.u32 %v200, 23
    %v202 = vor.u32 4788187, %v201
    %v203 = vand.u32 2147483647, %v202
    %v205 = vcvt.s32.f32 %v198
    %v206 = vmul.f32 %v205, %v203
    %v207 = vxor.u32 %v206, 2147483648
    %v208 = vsel %vm125, %v207, %v206
    %v209 = vsub.s32 4, %v185
    %v210 = vsel %vm125, %v209, %v185
    %v211 = vsel %vm124, %v19, %v208
    %v212 = vsel %vm124, 0, %v210
    %v213 = vcosq.f32.pop %v211
    %v214 = vsinq.f32.pop %v211
    %vm215 = vweird.f32 %v19
    %v216 = vadd.s32 %v212, 3
    %v217 = vand.u32 %v216, 3
    %vm218 = vcmp.lt.s32.totalorder %v217, 2
    %vm219 = vcmp.eq.s32.totalorder %v217, 0
    %v220 = vxor.u32 %v214, 2147483648
    %v221 = vsel %vm219, %v213, %v220
    %vm222 = vcmp.eq.s32.totalorder %v217, 2
    %v223 = vxor.u32 %v213, 2147483648
    %v224 = vsel %vm222, %v223, %v214
    %v225 = vsel %vm218, %v221, %v224
    %v226 = vsel %vm215, nan, %v225
    %v227 = vlaneseq
    %v228 = vshrl.u32 %v227, 7
    %v229 = vshra.s32 %v228, 2
    %v230 = vand.u32 %v229, 1
    %v231 = vshra.s32 %v228, 1
    %v232 = vand.u32 %v231, 1
    %v233 = vand.u32 %v228, 1
    %vm234 = vcmp.eq.s32.totalorder %v232, 0
    %vm235 = vcmp.eq.s32.totalorder %v230, 0
    %v236 = vlaneseq
    %v237 = vshrl.u32 %v236, 7
    %v238 = vsub.s32 0, %v237
    %v239 = vrot.slane %v122, %v238
    %v240 = vlaneseq
    %v241 = vshrl.u32 %v240, 7
    %v242 = vsub.s32 2, %v241
    %v243 = vrot.slane %v122, %v242
    %v244 = vsel %vm235, %v239, %v243
    %v245 = vlaneseq
    %v246 = vshrl.u32 %v245, 7
    %v247 = vsub.s32 0, %v246
    %v248 = vrot.slane %v226, %v247
    %v249 = vlaneseq
    %v250 = vshrl.u32 %v249, 7
    %v251 = vsub.s32 2, %v250
    %v252 = vrot.slane %v226, %v251
    %v253 = vsel %vm235, %v248, %v252
    %v254 = vsel %vm234, %v244, %v253
    %vm255 = vcmp.eq.s32.totalorder %v233, 0
    %v256 = vlaneseq
    %v257 = vshrl.u32 %v256, 7
    %v258 = vsub.s32 1, %v257
    %v259 = vrot.slane %v122, %v258
    %v260 = vlaneseq
    %v261 = vshrl.u32 %v260, 7
    %v262 = vsub.s32 3, %v261
    %v263 = vrot.slane %v122, %v262
    %v264 = vsel %vm235, %v259, %v263
    %v265 = vlaneseq
    %v266 = vshrl.u32 %v265, 7
    %v267 = vsub.s32 1, %v266
    %v268 = vrot.slane %v226, %v267
    %v269 = vlaneseq
    %v270 = vshrl.u32 %v269, 7
    %v271 = vsub.s32 3, %v270
    %v272 = vrot.slane %v226, %v271
    %v273 = vsel %vm235, %v268, %v272
    %v274 = vsel %vm255, %v264, %v273
    %v275 = vmul.f32 %v254, %v274
    %v276 = vld [vmem:[%s2] sm:$0xff]
    %v277 = vld [vmem:[%s2 + $0x8] sm:$0xff]
    %v278 = vld [vmem:[%s2 + $0x10] sm:$0xff]
    %v279 = vld [vmem:[%s2 + $0x18] sm:$0xff]
    %vm280 = vcmask 64512
    %v282 = vsel %vm280, %v276, 0
    %v285 = vsel %vm280, %v277, 0
    %v288 = vsel %vm280, %v278, 0
    %v291 = vsel %vm280, %v279, 0
    %293 = vmatprep.subr.mxu0 0.0
    %294 = vmatpush1.msra.mxu0 0.0
    %295 = vmatprep.subr.mxu0 0.0
    %296 = vmatpush1.msra.mxu0 0.0
    %297 = vmatprep.subr.mxu0 0.0
    %298 = vmatpush1.msra.mxu0 0.0
    %299 = vmatprep.subr.mxu0 0.0
    %300 = vmatpush1.msra.mxu0 0.0
    %301 = vmatprep.subr.mxu0 0.0
    %302 = vmatpush1.msra.mxu0 0.0
    %303 = vmatprep.subr.mxu0 0.0
    %304 = vmatpush1.msra.mxu0 0.0
    %305 = vmatprep.subr.mxu0 0.0
    %306 = vmatpush1.msra.mxu0 0.0
    %307 = vmatprep.subr.mxu0 0.0
    %308 = vmatpush1.msra.mxu0 0.0
    %309 = vmatprep.subr.mxu0 0.0
    %310 = vmatpush1.msra.mxu0 0.0
    %311 = vmatprep.subr.mxu0 0.0
    %312 = vmatpush1.msra.mxu0 0.0
    %313 = vmatprep.subr.mxu0 0.0
    %314 = vmatpush1.msra.mxu0 0.0
    %315 = vmatprep.subr.mxu0 0.0
    %316 = vmatpush1.msra.mxu0 0.0
    %317 = vmatprep.subr.mxu0 0.0
    %318 = vmatpush1.msra.mxu0 0.0
    %319 = vmatprep.subr.mxu0 0.0
    %320 = vmatpush1.msra.mxu0 0.0
    %321 = vmatprep.subr.mxu0 0.0
    %322 = vmatpush1.msra.mxu0 0.0
    %323 = vmatprep.subr.mxu0 0.0
    %324 = vmatpush1.msra.mxu0 %v275
    %325 = vmatprep.subr.mxu0 0.0
    %326 = vmatpush2.msra.mxu0 0.0
    %327 = vmatprep.subr.mxu0 0.0
    %328 = vmatpush2.msra.mxu0 0.0
    %329 = vmatprep.subr.mxu0 0.0
    %330 = vmatpush2.msra.mxu0 0.0
    %331 = vmatprep.subr.mxu0 0.0
    %332 = vmatpush2.msra.mxu0 0.0
    %333 = vmatprep.subr.mxu0 0.0
    %334 = vmatpush2.msra.mxu0 0.0
    %335 = vmatprep.subr.mxu0 0.0
    %336 = vmatpush2.msra.mxu0 0.0
    %337 = vmatprep.subr.mxu0 0.0
    %338 = vmatpush2.msra.mxu0 0.0
    %339 = vmatprep.subr.mxu0 0.0
    %340 = vmatpush2.msra.mxu0 0.0
    %341 = vmatprep.subr.mxu0 0.0
    %342 = vmatpush2.msra.mxu0 0.0
    %343 = vmatprep.subr.mxu0 0.0
    %344 = vmatpush2.msra.mxu0 0.0
    %345 = vmatprep.subr.mxu0 0.0
    %346 = vmatpush2.msra.mxu0 0.0
    %347 = vmatprep.subr.mxu0 0.0
    %348 = vmatpush2.msra.mxu0 0.0
    %349 = vmatprep.subr.mxu0 0.0
    %350 = vmatpush2.msra.mxu0 0.0
    %351 = vmatprep.subr.mxu0 0.0
    %352 = vmatpush2.msra.mxu0 0.0
    %353 = vmatprep.subr.mxu0 0.0
    %354 = vmatpush2.msra.mxu0 0.0
    %355 = vmatprep.subr.mxu0 0.0
    %356 = vmatpush2.msra.mxu0 0.0
    %357 = vmatprep.mubr.f32.mxu0 0.0
    %358 = vmatmul.mubr.f32.gmra.mxu0 %v282
    %v359 = vpop.f32.mrf.mxu0
    %v360 = vadd.f32 0.0, %v359
    %v361 = vpop.f32.mrf.mxu0
    %362 = vmatprep.mubr.f32.mxu0 0.0
    %363 = vmatmul.mubr.f32.gmra.mxu0 %v285
    %v364 = vpop.f32.mrf.mxu0
    %v365 = vadd.f32 0.0, %v364
    %v366 = vpop.f32.mrf.mxu0
    %367 = vmatprep.mubr.f32.mxu0 0.0
    %368 = vmatmul.mubr.f32.gmra.mxu0 %v288
    %v369 = vpop.f32.mrf.mxu0
    %v370 = vadd.f32 0.0, %v369
    %v371 = vpop.f32.mrf.mxu0
    %372 = vmatprep.mubr.f32.mxu0 0.0
    %373 = vmatmul.mubr.f32.gmra.mxu0 %v291
    %v374 = vpop.f32.mrf.mxu0
    %v375 = vadd.f32 0.0, %v374
    %v376 = vpop.f32.mrf.mxu0
    %377 = vdwg.mxu0
    %v378 = vmul.f32 %v360, %v370
    %v379 = vmul.f32 %v365, %v375
    %v380 = vld [vmem:[%s1] sm:$0xff]
    %v381 = vld [vmem:[%s1 + $0x8] sm:$0xff]
    %vm382 = vcmask 130048
    %v384 = vsel %vm382, %v380, 0
    %v387 = vsel %vm382, %v381, 0
    %389 = vmatprep.subr.mxu0 0.0
    %390 = vmatpush1.msra.mxu0 0.0
    %391 = vmatprep.subr.mxu0 0.0
    %392 = vmatpush1.msra.mxu0 0.0
    %393 = vmatprep.subr.mxu0 0.0
    %394 = vmatpush1.msra.mxu0 0.0
    %395 = vmatprep.subr.mxu0 0.0
    %396 = vmatpush1.msra.mxu0 0.0
    %397 = vmatprep.subr.mxu0 0.0
    %398 = vmatpush1.msra.mxu0 0.0
    %399 = vmatprep.subr.mxu0 0.0
    %400 = vmatpush1.msra.mxu0 0.0
    %401 = vmatprep.subr.mxu0 0.0
    %402 = vmatpush1.msra.mxu0 0.0
    %403 = vmatprep.subr.mxu0 0.0
    %404 = vmatpush1.msra.mxu0 0.0
    %405 = vmatprep.subr.mxu0 0.0
    %406 = vmatpush1.msra.mxu0 0.0
    %407 = vmatprep.subr.mxu0 0.0
    %408 = vmatpush1.msra.mxu0 0.0
    %409 = vmatprep.subr.mxu0 0.0
    %410 = vmatpush1.msra.mxu0 0.0
    %411 = vmatprep.subr.mxu0 0.0
    %412 = vmatpush1.msra.mxu0 0.0
    %413 = vmatprep.subr.mxu0 0.0
    %414 = vmatpush1.msra.mxu0 0.0
    %415 = vmatprep.subr.mxu0 0.0
    %416 = vmatpush1.msra.mxu0 0.0
    %417 = vmatprep.subr.mxu0 0.0
    %418 = vmatpush1.msra.mxu0 %v379
    %419 = vmatprep.subr.mxu0 0.0
    %420 = vmatpush1.msra.mxu0 %v378
    %421 = vmatprep.subr.mxu0 0.0
    %422 = vmatpush2.msra.mxu0 0.0
    %423 = vmatprep.subr.mxu0 0.0
    %424 = vmatpush2.msra.mxu0 0.0
    %425 = vmatprep.subr.mxu0 0.0
    %426 = vmatpush2.msra.mxu0 0.0
    %427 = vmatprep.subr.mxu0 0.0
    %428 = vmatpush2.msra.mxu0 0.0
    %429 = vmatprep.subr.mxu0 0.0
    %430 = vmatpush2.msra.mxu0 0.0
    %431 = vmatprep.subr.mxu0 0.0
    %432 = vmatpush2.msra.mxu0 0.0
    %433 = vmatprep.subr.mxu0 0.0
    %434 = vmatpush2.msra.mxu0 0.0
    %435 = vmatprep.subr.mxu0 0.0
    %436 = vmatpush2.msra.mxu0 0.0
    %437 = vmatprep.subr.mxu0 0.0
    %438 = vmatpush2.msra.mxu0 0.0
    %439 = vmatprep.subr.mxu0 0.0
    %440 = vmatpush2.msra.mxu0 0.0
    %441 = vmatprep.subr.mxu0 0.0
    %442 = vmatpush2.msra.mxu0 0.0
    %443 = vmatprep.subr.mxu0 0.0
    %444 = vmatpush2.msra.mxu0 0.0
    %445 = vmatprep.subr.mxu0 0.0
    %446 = vmatpush2.msra.mxu0 0.0
    %447 = vmatprep.subr.mxu0 0.0
    %448 = vmatpush2.msra.mxu0 0.0
    %449 = vmatprep.subr.mxu0 0.0
    %450 = vmatpush2.msra.mxu0 0.0
    %451 = vmatprep.subr.mxu0 0.0
    %452 = vmatpush2.msra.mxu0 0.0
    %453 = vmatprep.mubr.f32.mxu0 0.0
    %454 = vmatmul.mubr.f32.gmra.mxu0 %v384
    %v455 = vpop.f32.mrf.mxu0
    %v456 = vadd.f32 0.0, %v455
    %v457 = vpop.f32.mrf.mxu0
    %458 = vmatprep.mubr.f32.mxu0 0.0
    %459 = vmatmul.mubr.f32.gmra.mxu0 %v387
    %v460 = vpop.f32.mrf.mxu0
    %v461 = vadd.f32 0.0, %v460
    %v462 = vpop.f32.mrf.mxu0
    %463 = vdwg.mxu0
    %v464 = vmul.f32 %v456, %v456
    %v465 = vmul.f32 %v461, %v461
    %v466 = vld [vmem:[%s3] sm:$0xf]
    %v468 = vsel %vm382, %v466, 0
    %470 = vmatprep.subr.mxu0 0.0
    %471 = vmatpush1.msra.mxu0 0.0
    %472 = vmatprep.subr.mxu0 0.0
    %473 = vmatpush1.msra.mxu0 0.0
    %474 = vmatprep.subr.mxu0 0.0
    %475 = vmatpush1.msra.mxu0 0.0
    %476 = vmatprep.subr.mxu0 0.0
    %477 = vmatpush1.msra.mxu0 0.0
    %478 = vmatprep.subr.mxu0 0.0
    %479 = vmatpush1.msra.mxu0 0.0
    %480 = vmatprep.subr.mxu0 0.0
    %481 = vmatpush1.msra.mxu0 0.0
    %482 = vmatprep.subr.mxu0 0.0
    %483 = vmatpush1.msra.mxu0 0.0
    %484 = vmatprep.subr.mxu0 0.0
    %485 = vmatpush1.msra.mxu0 0.0
    %486 = vmatprep.subr.mxu0 0.0
    %487 = vmatpush1.msra.mxu0 0.0
    %488 = vmatprep.subr.mxu0 0.0
    %489 = vmatpush1.msra.mxu0 0.0
    %490 = vmatprep.subr.mxu0 0.0
    %491 = vmatpush1.msra.mxu0 0.0
    %492 = vmatprep.subr.mxu0 0.0
    %493 = vmatpush1.msra.mxu0 0.0
    %494 = vmatprep.subr.mxu0 0.0
    %495 = vmatpush1.msra.mxu0 0.0
    %496 = vmatprep.subr.mxu0 0.0
    %497 = vmatpush1.msra.mxu0 0.0
    %498 = vmatprep.subr.mxu0 0.0
    %499 = vmatpush1.msra.mxu0 %v465
    %500 = vmatprep.subr.mxu0 0.0
    %501 = vmatpush1.msra.mxu0 %v464
    %502 = vmatprep.subr.mxu0 0.0
    %503 = vmatpush2.msra.mxu0 0.0
    %504 = vmatprep.subr.mxu0 0.0
    %505 = vmatpush2.msra.mxu0 0.0
    %506 = vmatprep.subr.mxu0 0.0
    %507 = vmatpush2.msra.mxu0 0.0
    %508 = vmatprep.subr.mxu0 0.0
    %509 = vmatpush2.msra.mxu0 0.0
    %510 = vmatprep.subr.mxu0 0.0
    %511 = vmatpush2.msra.mxu0 0.0
    %512 = vmatprep.subr.mxu0 0.0
    %513 = vmatpush2.msra.mxu0 0.0
    %514 = vmatprep.subr.mxu0 0.0
    %515 = vmatpush2.msra.mxu0 0.0
    %516 = vmatprep.subr.mxu0 0.0
    %517 = vmatpush2.msra.mxu0 0.0
    %518 = vmatprep.subr.mxu0 0.0
    %519 = vmatpush2.msra.mxu0 0.0
    %520 = vmatprep.subr.mxu0 0.0
    %521 = vmatpush2.msra.mxu0 0.0
    %522 = vmatprep.subr.mxu0 0.0
    %523 = vmatpush2.msra.mxu0 0.0
    %524 = vmatprep.subr.mxu0 0.0
    %525 = vmatpush2.msra.mxu0 0.0
    %526 = vmatprep.subr.mxu0 0.0
    %527 = vmatpush2.msra.mxu0 0.0
    %528 = vmatprep.subr.mxu0 0.0
    %529 = vmatpush2.msra.mxu0 0.0
    %530 = vmatprep.subr.mxu0 0.0
    %531 = vmatpush2.msra.mxu0 0.0
    %532 = vmatprep.subr.mxu0 0.0
    %533 = vmatpush2.msra.mxu0 0.0
    %534 = vmatprep.mubr.f32.mxu0 0.0
    %535 = vmatmul.mubr.f32.gmra.mxu0 %v468
    %v536 = vpop.f32.mrf.mxu0
    %v537 = vadd.f32 0.0, %v536
    %v538 = vpop.f32.mrf.mxu0
    %539 = vdwg.mxu0
    %540 = vst [vmem:[#allocation2] sm:$0xf] %v537
    // Predicated region
    $region18: #{tpu_custom_call.1} parent=1 // pred_check
      _
    $region19: #{tpu_custom_call.1} parent=1 // pred_check_branch
      %542 = sbr.rel (0) target = $region21
    $region20: #{tpu_custom_call.1} parent=1 // pred_region
      %s544 = ssub.s32 64, 64
      %545 = vsyncadd [#allocation3], %s544
      %s547 = sshll.u32 [#allocation2], 4
      %s548 = int_to_ptr.vmem [resolvable:$true] %s547
      %550 = dma.vmem_to_hbm [thread:$0]  %s548, 64, %s4, [#allocation3]
    $region21: #{tpu_custom_call.1} parent=1 // pred_fallthru
      _
    // Predicated region
    $region22: #{tpu_custom_call.1} parent=1 // pred_check
      _
    $region23: #{tpu_custom_call.1} parent=1 // pred_check_branch
      %552 = sbr.rel (0) target = $region25
    $region24: #{tpu_custom_call.1} parent=1 // pred_region
      %553 = dma.done [#allocation3], 64
    $region25: #{tpu_custom_call.1} parent=1 // pred_fallthru
      _
    %554 = vsyncpa [#allocation3], 1

</llo_original>
